<compile_context>
chip_gen: v5e
topology: v5e:2x2
jax: 0.10.0
libtpu: 0.0.40
codegen_flags: <defaults>
</compile_context>

<pallas_src>
import math

import jax
import jax.numpy as jnp
from jax.experimental import pallas as pl
from jax.experimental.pallas import tpu as pltpu

_LANES = 128
# Per-x-block byte budget: double-buffered (x2) this stays under v5e's 16 MiB
# default scoped VMEM and well under half of v7x's 64 MiB physical VMEM.
_X_BLOCK_BUDGET_BYTES = 6 * 1024 * 1024
_VMEM_LIMIT_BYTES = 32 * 1024 * 1024


def _round_up(v, m):
    return -(-v // m) * m


def _sigmoid(z):
    # sigmoid(z) == 0.5 * (1 + tanh(z/2)) -- EUP tanh, exact to f32 rounding.
    return 0.5 * (jnp.tanh(0.5 * z) + 1.0)


# ----------------------------------------------------------------------------
# Kernels
# ----------------------------------------------------------------------------
def _rowsum_sigmoid_kernel(x_ref, w_ref, b_ref, o_ref):
    """Plain path: out = sigmoid(sum_k x[:,k]*w[k] + b), weight is a (1,K) row.

    VPU multiply + XLU lane reduction; f32 accumulation regardless of dtype.
    """
    x = x_ref[...].astype(jnp.float32)                 # (tile_m, K)
    w = w_ref[...].astype(jnp.float32)                 # (1, K)
    z = jnp.sum(x * w, axis=-1, keepdims=True)         # (tile_m, 1)
    z = z + b_ref[...].astype(jnp.float32)
    o_ref[...] = _sigmoid(z).astype(o_ref.dtype)


def _packed_matmul_sigmoid_kernel(x_ref, w_ref, b_ref, o_ref):
    """Small-K path: 128//K logical rows packed into the 128-lane axis.

    w_ref is a zero-padded block-diagonal (128, 128) matrix; column g holds the
    weight row for packed row g.  The matmul is fully (8,128)-aligned and runs
    on the otherwise-idle MXU; only the first out_cols columns are meaningful.
    """
    out_cols = o_ref.shape[-1]
    z = jnp.dot(x_ref[...], w_ref[...],
                preferred_element_type=jnp.float32)     # (tile_m, 128) f32
    z = z[:, :out_cols] + b_ref[...].astype(jnp.float32)
    o_ref[...] = _sigmoid(z).astype(o_ref.dtype)


# ----------------------------------------------------------------------------
# Wrapper
# ----------------------------------------------------------------------------
def _pick_tile_m(rows, k_lane, itemsize):
    if rows <= 8:
        return rows                          # full-dim block, no ragged block
    bytes_per_row = k_lane * itemsize
    budget_rows = max(8, (_X_BLOCK_BUDGET_BYTES // bytes_per_row) // 8 * 8)
    # Aim for >= 4 grid steps so DMA/compute pipelining kicks in and v7x's two
    # TensorCores both get work on the "parallel" axis.
    target_rows = max(8, _round_up(pl.cdiv(rows, 4), 8))
    return min(budget_rows, target_rows)


def linear_discriminator_forward(x, weight, bias):
    """Fused y = sigmoid(x @ weight.T + bias).

    x: (..., K) ; weight: (1, K) (torch nn.Linear layout) ; bias: (1,).
    Returns an array of shape (..., 1).
    """
    *lead, K = x.shape
    assert weight.shape == (1, K), weight.shape
    assert bias.shape == (1,), bias.shape
    M = math.prod(lead)
    x2d = x.reshape(M, K)

    groups = _LANES // K if (0 < K < _LANES and _LANES % K == 0) else 1
    pack = groups > 1 and M % groups == 0 and M // groups >= 8

    if pack:
        rows, k_lane, out_cols = M // groups, _LANES, groups
        x_in = x2d.reshape(rows, _LANES)          # contiguous -> free reshape
        # Block-diagonal weight: w_mat[g*K + j, g] = weight[0, j], padded to
        # (128, 128) so the in-kernel matmul is fully aligned.
        w_small = (jnp.eye(groups, dtype=weight.dtype)[:, None, :]
                   * weight.reshape(-1)[None, :, None]).reshape(_LANES, groups)
        w_mat = jnp.pad(w_small, ((0, 0), (0, _LANES - groups)))
        kernel = _packed_matmul_sigmoid_kernel
    else:
        rows, k_lane, out_cols = M, K, 1
        x_in = x2d
        w_mat = weight                            # (1, K) row for the VPU path
        kernel = _rowsum_sigmoid_kernel

    tile_m = _pick_tile_m(rows, k_lane, x_in.dtype.itemsize)
    grid_m = pl.cdiv(rows, tile_m)   # ragged last block: no host pad, no slice

    out = pl.pallas_call(
        kernel,
        out_shape=jax.ShapeDtypeStruct((rows, out_cols), x.dtype),
        grid=(grid_m,),
        in_specs=[
            pl.BlockSpec((tile_m, k_lane), lambda i: (i, 0)),        # x tile
            pl.BlockSpec(w_mat.shape, lambda i: (0, 0)),             # weight
            pl.BlockSpec((1, 1), lambda i: (0, 0)),                  # bias
        ],
        out_specs=pl.BlockSpec((tile_m, out_cols), lambda i: (i, 0)),
        compiler_params=pltpu.CompilerParams(
            dimension_semantics=("parallel",),
            vmem_limit_bytes=_VMEM_LIMIT_BYTES,
        ),
    )(x_in, w_mat, bias.reshape(1, 1))

    return out.reshape(*lead, 1)


# ----------------------------------------------------------------------------
# Deterministic parameter init (mirrors torch.nn.Linear default: U(+-1/sqrt(K)))
# ----------------------------------------------------------------------------
def init_params(key, input_features):
    kw, kb = jax.random.split(key)
    bound = 1.0 / math.sqrt(input_features)
    weight = jax.random.uniform(kw, (1, input_features), jnp.float32,
                                minval=-bound, maxval=bound)
    bias = jax.random.uniform(kb, (1,), jnp.float32, minval=-bound, maxval=bound)
    return weight, bias


if __name__ == "__main__":
    key = jax.random.PRNGKey(0)
    k_param, k1, k2, k3 = jax.random.split(key, 4)

    input_features = 32
    weight, bias = init_params(k_param, input_features)

    def check(x):
        out = jax.block_until_ready(linear_discriminator_forward(x, weight, bias))
        ref = jax.nn.sigmoid(x @ weight.T + bias)
        assert out.shape == x.shape[:-1] + (1,), out.shape
        assert bool(jnp.all(jnp.isfinite(out)))
        assert bool(jnp.allclose(out, ref, atol=1e-5, rtol=1e-5)), \
            float(jnp.max(jnp.abs(out - ref)))

    # Primary small demo shape: batch=8, input_features=32 (plain path).
    check(jax.random.normal(k1, (8, input_features), jnp.float32))
    # Lane-packed path, multi-block grid with a ragged last block (no padding).
    check(jax.random.normal(k2, (104, input_features), jnp.float32))
    # Un-packable batch (M not a multiple of 128/K): plain path, ragged block.
    check(jax.random.normal(k3, (13, input_features), jnp.float32))

    print("KERNEL_OK")
</pallas_src>

<mosaic_0001>
module attributes {stable_mosaic.version = 11 : i64} {
  func.func @_rowsum_sigmoid_kernel(%arg0: i32, %arg1: memref<8x32xf32, #tpu.memory_space<vmem>>, %arg2: memref<1x32xf32, #tpu.memory_space<vmem>>, %arg3: memref<1x1xf32, #tpu.memory_space<vmem>>, %arg4: memref<8x1xf32, #tpu.memory_space<vmem>>) attributes {dimension_semantics = [#tpu.dimension_semantics<parallel>], iteration_bounds = array<i64: 1>, scalar_prefetch = 0 : i64, scratch_operands = 0 : i64, tpu.core_type = #tpu.core_type<tc>, window_params = [{transform_indices = @transform_0, window_bounds = array<i64: 8, 32>}, {pipeline_mode = #tpu.pipeline_mode<synchronous>, transform_indices = @transform_1, window_bounds = array<i64: 1, 32>}, {pipeline_mode = #tpu.pipeline_mode<synchronous>, transform_indices = @transform_2, window_bounds = array<i64: 1, 1>}, {transform_indices = @transform_3, window_bounds = array<i64: 8, 1>}]} {
    %c0 = arith.constant 0 : index
    %c0_0 = arith.constant 0 : index
    %0 = vector.load %arg1[%c0, %c0_0] : memref<8x32xf32, #tpu.memory_space<vmem>>, vector<8x32xf32>
    %c0_1 = arith.constant 0 : index
    %c0_2 = arith.constant 0 : index
    %1 = vector.load %arg2[%c0_1, %c0_2] : memref<1x32xf32, #tpu.memory_space<vmem>>, vector<1x32xf32>
    %2 = vector.broadcast %1 : vector<1x32xf32> to vector<8x32xf32>
    %3 = arith.mulf %0, %2 : vector<8x32xf32>
    %cst = arith.constant dense<0.000000e+00> : vector<8xf32>
    %4 = vector.multi_reduction <add>, %3, %cst [1] : vector<8x32xf32> to vector<8xf32>
    %5 = vector.shape_cast %4 : vector<8xf32> to vector<8x1xf32>
    %c0_3 = arith.constant 0 : index
    %c0_4 = arith.constant 0 : index
    %6 = vector.load %arg3[%c0_3, %c0_4] : memref<1x1xf32, #tpu.memory_space<vmem>>, vector<1x1xf32>
    %7 = vector.broadcast %6 : vector<1x1xf32> to vector<8x1xf32>
    %8 = arith.addf %5, %7 : vector<8x1xf32>
    %cst_5 = arith.constant 5.000000e-01 : f32
    %9 = vector.broadcast %cst_5 : f32 to vector<8x1xf32>
    %10 = arith.mulf %9, %8 : vector<8x1xf32>
    %11 = math.tanh %10 : vector<8x1xf32>
    %cst_6 = arith.constant 1.000000e+00 : f32
    %12 = vector.broadcast %cst_6 : f32 to vector<8x1xf32>
    %13 = arith.addf %11, %12 : vector<8x1xf32>
    %cst_7 = arith.constant 5.000000e-01 : f32
    %14 = vector.broadcast %cst_7 : f32 to vector<8x1xf32>
    %15 = arith.mulf %14, %13 : vector<8x1xf32>
    %c0_8 = arith.constant 0 : index
    %c0_9 = arith.constant 0 : index
    %16 = vector.load %arg4[%c0_8, %c0_9] : memref<8x1xf32, #tpu.memory_space<vmem>>, vector<8x1xf32>
    tpu.vector_store %arg4[%c0_8, %c0_9], %15 {strides = array<i32>} : memref<8x1xf32, #tpu.memory_space<vmem>>, vector<8x1xf32>,
    return
  }
  func.func @transform_0(%arg0: i32) -> (i32, i32) {
    %c0_i32 = arith.constant 0 : i32
    %c0_i32_0 = arith.constant 0 : i32
    return %arg0, %c0_i32 : i32, i32
  }
  func.func @transform_1(%arg0: i32) -> (i32, i32) {
    %c0_i32 = arith.constant 0 : i32
    %c0_i32_0 = arith.constant 0 : i32
    %c0_i32_1 = arith.constant 0 : i32
    return %c0_i32, %c0_i32_0 : i32, i32
  }
  func.func @transform_2(%arg0: i32) -> (i32, i32) {
    %c0_i32 = arith.constant 0 : i32
    %c0_i32_0 = arith.constant 0 : i32
    %c0_i32_1 = arith.constant 0 : i32
    return %c0_i32, %c0_i32_0 : i32, i32
  }
  func.func @transform_3(%arg0: i32) -> (i32, i32) {
    %c0_i32 = arith.constant 0 : i32
    %c0_i32_0 = arith.constant 0 : i32
    return %arg0, %c0_i32 : i32, i32
  }
}

</mosaic_0001>

<llo_original>
// kernel: tpu_custom_call.1
$region0: #{tpu_custom_call.1}
  #allocation0 [shape = 'u32[]', space=smem, size = 0x4, offset = 0x4, fixed_abs, tag = 'smem constant byte address 0x4 - core index']
  #allocation1 [shape = 'u32[72,128]{1,0:T(1,128)}', space=vmem, size = 0x9000, scoped, tag = 'internal scratch']
  #allocation2 [shape = 'f32[1,1]{1,0:T(1,128)S(1)}', space=vmem, size = 0x200, scoped, tag = 'scoped memory for tpu_custom_call.1']
  %s0 = inlined_call_operand.hbm [shape: f32[8,32], index: 0, kind: input, shape index: {}]
  %s1 = inlined_call_operand.vmem [shape: f32[1,32], index: 1, kind: input, shape index: {}]
  %s2 = inlined_call_operand.<no memory space> [shape: f32[1,1], index: 2, kind: input, shape index: {}]
  %s3 = inlined_call_operand.vmem [shape: f32[8,1], index: 3, kind: output, shape index: {}]
  %s4 = sld [smem:[#allocation0]]
  $region26: #{tpu_custom_call.1} parent=0
    _
  %s6 = ssub.s32 1, %s4
  %s7 = scalar_select 0, %s6, %s4
  %v8 = vstv %s2
  %9 = vst [vmem:[#allocation2] sm:$0x1] %v8
  $region1: #{tpu_custom_call.1} parent=0
    #allocation3 [shape = 'u8[4096]{0}', space=vmem, size = 0x1000, scoped, tag = 'input window, operand 0, single buffered']
    #allocation4 [shape = 's32[1]{0}', space=sflag, size = 0x4, scoped, tag = 'scoped memory for tpu_custom_call.1']
    %10 = vsyncpa [#allocation4], 0
    // Predicated region
    $region2: #{tpu_custom_call.1} parent=1 // pred_check
      _
    $region3: #{tpu_custom_call.1} parent=1 // pred_check_branch
      %12 = sbr.rel (0) target = $region5
    $region4: #{tpu_custom_call.1} parent=1 // pred_region
      %14 = vsyncadd [#allocation4], 0
      %s16 = sshll.u32 %s0, 4
      %s17 = int_to_ptr.hbm [resolvable:$true] %s16
      %s18 = sshll.u32 [#allocation3], 4
      %s19 = int_to_ptr.vmem [resolvable:$true] %s18
      %21 = dma.hbm_to_vmem [thread:$0]  %s17, 128, %s19, [#allocation4]
    $region5: #{tpu_custom_call.1} parent=1 // pred_fallthru
      _
    // Predicated region
    $region6: #{tpu_custom_call.1} parent=1 // pred_check
      _
    $region7: #{tpu_custom_call.1} parent=1 // pred_check_branch
      %23 = sbr.rel (0) target = $region9
    $region8: #{tpu_custom_call.1} parent=1 // pred_region
      _
    $region9: #{tpu_custom_call.1} parent=1 // pred_fallthru
      _
    // Predicated region
    $region10: #{tpu_custom_call.1} parent=1 // pred_check
      _
    $region11: #{tpu_custom_call.1} parent=1 // pred_check_branch
      %25 = sbr.rel (0) target = $region13
    $region12: #{tpu_custom_call.1} parent=1 // pred_region
      _
    $region13: #{tpu_custom_call.1} parent=1 // pred_fallthru
      _
    // Predicated region
    $region14: #{tpu_custom_call.1} parent=1 // pred_check
      _
    $region15: #{tpu_custom_call.1} parent=1 // pred_check_branch
      %27 = sbr.rel (0) target = $region17
    $region16: #{tpu_custom_call.1} parent=1 // pred_region
      %29 = dma.done [#allocation4], 128
    $region17: #{tpu_custom_call.1} parent=1 // pred_fallthru
      _
    %v30 = vld [vmem:[#allocation3] sm:$0xff]
    %v31 = vld [vmem:[%s1] sm:$0x1]
    %v33 = vperm.slane %v31, 0
    %v35 = vmul.f32 %v30, %v33
    %vm36 = vcmask 261120
    %v37 = vsel %vm36, %v35, 0.0
    %38 = vadd.xlane.f32.xlu0 %v37
    %v39 = vpop.xlane.xlu0 %38
    %v40 = vld [vmem:[#allocation2] sm:$0x1]
    %v42 = vperm.slane %v40, 0
    %v44 = vadd.f32 %v39, %v42
    %v45 = vmul.f32 %v44, 0.5
    %v46 = vtanh.pop %v45
    %v47 = vadd.f32 %v46, 1.0
    %v48 = vmul.f32 %v47, 0.5
    %vm49 = vcmask 7168
    %50 = vst.msk [vmem:[%s3] sm:$0xff] %vm49, %v48
    // Predicated region
    $region18: #{tpu_custom_call.1} parent=1 // pred_check
      _
    $region19: #{tpu_custom_call.1} parent=1 // pred_check_branch
      %52 = sbr.rel (0) target = $region21
    $region20: #{tpu_custom_call.1} parent=1 // pred_region
      _
    $region21: #{tpu_custom_call.1} parent=1 // pred_fallthru
      _
    // Predicated region
    $region22: #{tpu_custom_call.1} parent=1 // pred_check
      _
    $region23: #{tpu_custom_call.1} parent=1 // pred_check_branch
      %54 = sbr.rel (0) target = $region25
    $region24: #{tpu_custom_call.1} parent=1 // pred_region
      _
    $region25: #{tpu_custom_call.1} parent=1 // pred_fallthru
      _
    %55 = vsyncpa [#allocation4], 1

</llo_original>
